<compile_context>
chip_gen: v7x
topology: tpu7x:2x2x1
jax: 0.10.0
libtpu: 0.0.40
codegen_flags: <defaults>
</compile_context>

<pallas_src>
import functools

import jax
import jax.numpy as jnp
from jax.experimental import pallas as pl
from jax.experimental.pallas import tpu as pltpu


def _round_up(x, m):
    return ((x + m - 1) // m) * m


def _vmem_capacity_bytes():
    try:
        return int(pltpu.get_tpu_info().vmem_capacity_bytes)
    except Exception:
        return 64 * 1024 * 1024  # conservative fallback (v7x per-TensorCore)


def prepare_embedding_params(weight, bias, *, compute_dtype=None):
    """One-time (module-init-time) layout prep. NOT in the per-call hot path.

    weight: (out_dim, in_dim)  [PyTorch nn.Linear layout]
    bias:   (out_dim,)

    Returns (w_t, b_p, out_dim):
      w_t: (in_p, out_p) zero-padded, transposed (ready for a plain MXU dot),
           optionally cast to `compute_dtype` (e.g. bf16).
      b_p: (1, out_p) float32 (added after f32 accumulation).
    Zero padding is exact for both the matmul and the per-row L2 norm.
    """
    out_dim, in_dim = weight.shape
    assert bias.shape == (out_dim,)
    in_p = _round_up(in_dim, 128)
    out_p = _round_up(out_dim, 128)

    w = weight.astype(compute_dtype) if compute_dtype is not None else weight
    w_t = jnp.transpose(w)  # (in_dim, out_dim)
    if (in_p, out_p) != (in_dim, out_dim):
        w_t = jnp.pad(w_t, ((0, in_p - in_dim), (0, out_p - out_dim)))

    b_p = bias.astype(jnp.float32).reshape(1, out_dim)
    if out_p != out_dim:
        b_p = jnp.pad(b_p, ((0, 0), (0, out_p - out_dim)))
    return w_t, b_p, out_dim


def _embedding_kernel(x_ref, w_ref, b_ref, o_ref, *scratch, l2_norm, eps, nk):
    def _finish(y):
        y = y + b_ref[...]                      # (tb, out_p) + (1, out_p), f32
        if l2_norm:
            # F.normalize(p=2, dim=1): x / max(||x||_2, eps).  Clamp the squared
            # norm at eps^2 and use rsqrt -> EUP slot, no exact divide on VPU.
            sq = jnp.sum(y * y, axis=-1, keepdims=True)
            y = y * jax.lax.rsqrt(jnp.maximum(sq, eps * eps))
        return y.astype(o_ref.dtype)

    if nk == 1:
        # Weight fully resident: single matmul per batch tile.
        y = jnp.dot(x_ref[...], w_ref[...], preferred_element_type=jnp.float32)
        o_ref[...] = _finish(y)
    else:
        # K-split: accumulate partial products in an f32 scratch, finalize at
        # the last K step (bias add + normalize + store).
        acc_ref, = scratch
        k = pl.program_id(1)

        @pl.when(k == 0)
        def _():
            acc_ref[...] = jnp.zeros_like(acc_ref)

        acc_ref[...] += jnp.dot(x_ref[...], w_ref[...],
                                preferred_element_type=jnp.float32)

        @pl.when(k == nk - 1)
        def _():
            o_ref[...] = _finish(acc_ref[...])


def embedding_forward(x, w_t, b_p, out_dim, *, l2_norm=True, eps=1e-12,
                      tb=None, compute_dtype=None):
    """x: (B, in_dim). w_t/b_p from prepare_embedding_params()."""
    B, in_dim = x.shape
    in_p, out_p = w_t.shape
    assert in_p >= in_dim and out_p >= out_dim and b_p.shape == (1, out_p)

    out_dtype = x.dtype
    if compute_dtype is not None:
        x = x.astype(compute_dtype)

    # Only the activation is padded per call (weight padding is hoisted).
    x_p = x if in_p == in_dim else jnp.pad(x, ((0, 0), (0, in_p - in_dim)))

    # Batch tile: for small B the kernel is weight-HBM-bound -> one step (do
    # NOT shard across v7x cores, each core would re-read the weight).  For
    # large B (compute-bound) make >= 2 steps so both v7x TCs get work and the
    # pipeline has something to overlap.
    if tb is None:
        if B <= 256:
            tb = _round_up(B, 8)
        else:
            n_steps = max(2, -(-B // 256))
            tb = _round_up(-(-B // n_steps), 8)
    tb = max(8, _round_up(tb, 8))

    x_isz = jnp.dtype(x_p.dtype).itemsize
    w_isz = jnp.dtype(w_t.dtype).itemsize
    o_isz = jnp.dtype(out_dtype).itemsize

    capacity = _vmem_capacity_bytes()
    budget = int(0.7 * capacity)

    def vmem_need(tk_):
        nk_ = in_p // tk_
        buf_w = 1 if nk_ == 1 else 2            # resident vs. double-buffered
        acc = tb * out_p * 4 if nk_ > 1 else 0
        return (buf_w * tk_ * out_p * w_isz
                + 2 * tb * tk_ * x_isz
                + 2 * tb * out_p * o_isz
                + out_p * 4
                + acc)

    # K tile: largest multiple of 128 that evenly divides in_p and fits VMEM.
    units = in_p // 128
    cands = [d * 128 for d in range(units, 0, -1) if units % d == 0]
    tk = None
    for c in cands:
        if vmem_need(c) <= budget:
            tk = c
            break
    if tk is None:
        tk = cands[-1]                          # 128; limit raised below
    nk = in_p // tk

    need = vmem_need(tk)
    vmem_limit = None
    if need > 12 * 1024 * 1024:                 # default scoped: 16 MiB on v5e
        vmem_limit = min(max(int(need * 1.25), need + (2 << 20)),
                         int(0.9 * capacity))

    grid = (pl.cdiv(B, tb), nk)
    # NOTE: if B is not a multiple of tb, the last batch tile reads undefined
    # rows of x_p; rows are independent and those output rows land out of
    # bounds (dropped), so this is benign — do not add a mask for it.

    kernel = functools.partial(_embedding_kernel, l2_norm=l2_norm, eps=eps, nk=nk)

    cost = pl.CostEstimate(
        flops=2 * B * in_p * out_p,
        transcendentals=B if l2_norm else 0,
        bytes_accessed=(B * in_p * x_isz + in_p * out_p * w_isz
                        + out_p * 4 + B * out_p * o_isz),
    )

    if nk == 1:
        # Weight/bias never change across the grid: single-buffer, resident.
        w_spec = pl.BlockSpec((tk, out_p), lambda i, k: (k, 0),
                              pipeline_mode=pl.Buffered(1))
        scratch_shapes = []
    else:
        w_spec = pl.BlockSpec((tk, out_p), lambda i, k: (k, 0))
        scratch_shapes = [pltpu.VMEM((tb, out_p), jnp.float32)]

    out = pl.pallas_call(
        kernel,
        out_shape=jax.ShapeDtypeStruct((B, out_p), out_dtype),
        grid_spec=pltpu.PrefetchScalarGridSpec(
            num_scalar_prefetch=0,
            grid=grid,
            in_specs=[
                pl.BlockSpec((tb, tk), lambda i, k: (i, k)),
                w_spec,
                pl.BlockSpec((1, out_p), lambda i, k: (0, 0),
                             pipeline_mode=pl.Buffered(1)),
            ],
            out_specs=pl.BlockSpec((tb, out_p), lambda i, k: (i, 0)),
            scratch_shapes=scratch_shapes,
        ),
        compiler_params=pltpu.CompilerParams(
            dimension_semantics=("parallel", "arbitrary"),
            vmem_limit_bytes=vmem_limit,
        ),
        cost_estimate=cost,
    )(x_p, w_t, b_p)

    # TODO(synk): for mem-bound non-multiple-of-128 out_dim, a full-dim
    # (masked-store) output block can beat this extra slice pass; benchmark.
    return out if out_p == out_dim else out[:, :out_dim]


def embedding_reference(x, weight, bias, l2_norm=True):
    y = x @ weight.T + bias
    if l2_norm:
        n = jnp.sqrt(jnp.sum(y * y, axis=1, keepdims=True))
        y = y / jnp.maximum(n, 1e-12)
    return y


if __name__ == "__main__":
    key = jax.random.PRNGKey(0)
    k_x, k_w, k_b = jax.random.split(key, 3)

    batch, input_dim, output_dim = 8, 32, 64

    x = jax.random.normal(k_x, (batch, input_dim), dtype=jnp.float32)
    # Deterministic "PyTorch-Linear-like" init (uniform in +/- 1/sqrt(in_dim)).
    bound = 1.0 / (input_dim ** 0.5)
    weight = jax.random.uniform(k_w, (output_dim, input_dim),
                                minval=-bound, maxval=bound, dtype=jnp.float32)
    bias = jax.random.uniform(k_b, (output_dim,),
                              minval=-bound, maxval=bound, dtype=jnp.float32)

    # One-time param prep (hoisted out of the per-call hot path).
    w_t, b_p, odim = prepare_embedding_params(weight, bias)

    # l2_norm=True (default forward path)
    out = jax.block_until_ready(embedding_forward(x, w_t, b_p, odim))
    ref = embedding_reference(x, weight, bias)
    assert out.shape == (batch, output_dim)
    assert jnp.allclose(out, ref, atol=1e-5, rtol=1e-5), "mismatch (l2_norm=True)"

    # l2_norm=False path
    out2 = jax.block_until_ready(embedding_forward(x, w_t, b_p, odim, l2_norm=False))
    ref2 = embedding_reference(x, weight, bias, l2_norm=False)
    assert jnp.allclose(out2, ref2, atol=1e-5, rtol=1e-5), "mismatch (l2_norm=False)"

    # Optional bf16 compute path (f32 accumulation, f32 output).
    w_t16, b_p16, odim16 = prepare_embedding_params(weight, bias,
                                                    compute_dtype=jnp.bfloat16)
    out3 = jax.block_until_ready(
        embedding_forward(x, w_t16, b_p16, odim16, compute_dtype=jnp.bfloat16))
    assert out3.shape == (batch, output_dim)
    assert bool(jnp.all(jnp.isfinite(out3)))
    assert jnp.allclose(out3, ref, atol=5e-2, rtol=5e-2), "mismatch (bf16 path)"

    print("KERNEL_OK")
</pallas_src>

<mosaic_0001>
module attributes {stable_mosaic.version = 11 : i64} {
  func.func @_embedding_kernel(%arg0: i32, %arg1: i32, %arg2: memref<8x128xf32, #tpu.memory_space<vmem>>, %arg3: memref<128x128xf32, #tpu.memory_space<vmem>>, %arg4: memref<1x128xf32, #tpu.memory_space<vmem>>, %arg5: memref<8x128xf32, #tpu.memory_space<vmem>>) attributes {dimension_semantics = [#tpu.dimension_semantics<parallel>, #tpu.dimension_semantics<arbitrary>], iteration_bounds = array<i64: 1, 1>, scalar_prefetch = 0 : i64, scratch_operands = 0 : i64, tpu.core_type = #tpu.core_type<tc>, window_params = [{transform_indices = @transform_0, window_bounds = array<i64: 8, 128>}, {pipeline_mode = #tpu.pipeline_mode<synchronous>, transform_indices = @transform_1, window_bounds = array<i64: 128, 128>}, {pipeline_mode = #tpu.pipeline_mode<synchronous>, transform_indices = @transform_2, window_bounds = array<i64: 1, 128>}, {transform_indices = @transform_3, window_bounds = array<i64: 8, 128>}]} {
    %c0 = arith.constant 0 : index
    %c0_0 = arith.constant 0 : index
    %0 = vector.load %arg2[%c0, %c0_0] : memref<8x128xf32, #tpu.memory_space<vmem>>, vector<8x128xf32>
    %c0_1 = arith.constant 0 : index
    %c0_2 = arith.constant 0 : index
    %1 = vector.load %arg3[%c0_1, %c0_2] : memref<128x128xf32, #tpu.memory_space<vmem>>, vector<128x128xf32>
    %cst = arith.constant dense<0.000000e+00> : vector<8x128xf32>
    %2 = tpu.matmul %0, %1, %cst {dimension_numbers = #tpu.dot_dimension_numbers<[1], [0], [0], [1], [0, 0, 1, 1], [], []>} : vector<8x128xf32>, vector<128x128xf32>, vector<8x128xf32> -> vector<8x128xf32>
    %c0_3 = arith.constant 0 : index
    %c0_4 = arith.constant 0 : index
    %3 = vector.load %arg4[%c0_3, %c0_4] : memref<1x128xf32, #tpu.memory_space<vmem>>, vector<1x128xf32>
    %4 = vector.broadcast %3 : vector<1x128xf32> to vector<8x128xf32>
    %5 = arith.addf %2, %4 : vector<8x128xf32>
    %6 = arith.mulf %5, %5 : vector<8x128xf32>
    %cst_5 = arith.constant dense<0.000000e+00> : vector<8xf32>
    %7 = vector.multi_reduction <add>, %6, %cst_5 [1] : vector<8x128xf32> to vector<8xf32>
    %8 = vector.shape_cast %7 : vector<8xf32> to vector<8x1xf32>
    %cst_6 = arith.constant 1.000000e-24 : f32
    %9 = vector.broadcast %cst_6 : f32 to vector<8x1xf32>
    %10 = arith.maximumf %8, %9 : vector<8x1xf32>
    %11 = math.rsqrt %10 : vector<8x1xf32>
    %12 = vector.broadcast %11 : vector<8x1xf32> to vector<8x128xf32>
    %13 = arith.mulf %5, %12 : vector<8x128xf32>
    %c0_7 = arith.constant 0 : index
    %c0_8 = arith.constant 0 : index
    %14 = vector.load %arg5[%c0_7, %c0_8] : memref<8x128xf32, #tpu.memory_space<vmem>>, vector<8x128xf32>
    tpu.vector_store %arg5[%c0_7, %c0_8], %13 {strides = array<i32>} : memref<8x128xf32, #tpu.memory_space<vmem>>, vector<8x128xf32>,
    return
  }
  func.func @transform_0(%arg0: i32, %arg1: i32) -> (i32, i32) {
    %c0_i32 = arith.constant 0 : i32
    return %arg0, %arg1 : i32, i32
  }
  func.func @transform_1(%arg0: i32, %arg1: i32) -> (i32, i32) {
    %c0_i32 = arith.constant 0 : i32
    %c0_i32_0 = arith.constant 0 : i32
    return %arg1, %c0_i32 : i32, i32
  }
  func.func @transform_2(%arg0: i32, %arg1: i32) -> (i32, i32) {
    %c0_i32 = arith.constant 0 : i32
    %c0_i32_0 = arith.constant 0 : i32
    %c0_i32_1 = arith.constant 0 : i32
    return %c0_i32, %c0_i32_0 : i32, i32
  }
  func.func @transform_3(%arg0: i32, %arg1: i32) -> (i32, i32) {
    %c0_i32 = arith.constant 0 : i32
    %c0_i32_0 = arith.constant 0 : i32
    return %arg0, %c0_i32 : i32, i32
  }
}

</mosaic_0001>

<llo_original>
// kernel: tpu_custom_call.1
$region0: #{tpu_custom_call.1}
  #allocation0 [shape = 'u32[]', space=smem, size = 0x4, offset = 0x4, fixed_abs, tag = 'smem constant byte address 0x4 - core index']
  #allocation1 [shape = 'u32[144,128]{1,0:T(1,128)}', space=vmem, size = 0x12000, scoped, tag = 'internal scratch']
  %s0 = inlined_call_operand.hbm [shape: f32[8,128], index: 0, kind: input, shape index: {}]
  %s1 = inlined_call_operand.hbm [shape: f32[128,128], index: 1, kind: input, shape index: {}]
  %s2 = inlined_call_operand.vmem [shape: f32[1,128], index: 2, kind: input, shape index: {}]
  %s3 = inlined_call_operand.hbm [shape: f32[8,128], index: 3, kind: output, shape index: {}]
  %s4 = sld [smem:[#allocation0]]
  $region30: #{tpu_custom_call.1} parent=0
    _
  %s6 = ssub.s32 1, %s4
  %s7 = scalar_select 0, %s6, %s4
  $region1: #{tpu_custom_call.1} parent=0
    #allocation2 [shape = 'u8[4096]{0}', space=vmem, size = 0x1000, scoped, tag = 'input window, operand 0, single buffered']
    #allocation3 [shape = 's32[1]{0}', space=sflag, size = 0x4, scoped, tag = 'scoped memory for tpu_custom_call.1']
    #allocation4 [shape = 's32[1]{0}', space=sflag, size = 0x4, scoped, tag = 'scoped memory for tpu_custom_call.1']
    #allocation5 [shape = 'u8[65536]{0}', space=vmem, size = 0x10000, scoped, tag = 'input window, operand 1, single buffered']
    #allocation6 [shape = 's32[1]{0}', space=sflag, size = 0x4, scoped, tag = 'scoped memory for tpu_custom_call.1']
    #allocation7 [shape = 'u8[4096]{0}', space=vmem, size = 0x1000, scoped, tag = 'output window, operand 0, single buffered']
    %8 = vsyncpa [#allocation3], 0
    %9 = vsyncpa [#allocation6], 0
    %10 = vsyncpa [#allocation4], 0
    // Predicated region
    $region2: #{tpu_custom_call.1} parent=1 // pred_check
      _
    $region3: #{tpu_custom_call.1} parent=1 // pred_check_branch
      %12 = sbr.rel (0) target = $region5
    $region4: #{tpu_custom_call.1} parent=1 // pred_region
      %s14 = ssub.s32 128, 128
      %15 = vsyncadd [#allocation3], %s14
      %s17 = sshll.u32 [#allocation2], 4
      %s18 = int_to_ptr.vmem [resolvable:$true] %s17
      %20 = dma.hbm_to_vmem [thread:$0]  %s0, 128, %s18, [#allocation3]
    $region5: #{tpu_custom_call.1} parent=1 // pred_fallthru
      _
    // Predicated region
    $region6: #{tpu_custom_call.1} parent=1 // pred_check
      _
    $region7: #{tpu_custom_call.1} parent=1 // pred_check_branch
      %22 = sbr.rel (0) target = $region9
    $region8: #{tpu_custom_call.1} parent=1 // pred_region
      %s24 = ssub.s32 2048, 2048
      %25 = vsyncadd [#allocation6], %s24
      %s26 = sshll.u32 [#allocation5], 4
      %s27 = int_to_ptr.vmem [resolvable:$true] %s26
      %32 = dma.hbm_to_vmem [thread:$0]  %s1, 2048, %s27, [#allocation6], 128, 128, 8
    $region9: #{tpu_custom_call.1} parent=1 // pred_fallthru
      _
    // Predicated region
    $region10: #{tpu_custom_call.1} parent=1 // pred_check
      _
    $region11: #{tpu_custom_call.1} parent=1 // pred_check_branch
      %34 = sbr.rel (0) target = $region13
    $region12: #{tpu_custom_call.1} parent=1 // pred_region
      _
    $region13: #{tpu_custom_call.1} parent=1 // pred_fallthru
      _
    // Predicated region
    $region14: #{tpu_custom_call.1} parent=1 // pred_check
      _
    $region15: #{tpu_custom_call.1} parent=1 // pred_check_branch
      %36 = sbr.rel (0) target = $region17
    $region16: #{tpu_custom_call.1} parent=1 // pred_region
      %37 = dma.done [#allocation3], 128
    $region17: #{tpu_custom_call.1} parent=1 // pred_fallthru
      _
    // Predicated region
    $region18: #{tpu_custom_call.1} parent=1 // pred_check
      _
    $region19: #{tpu_custom_call.1} parent=1 // pred_check_branch
      %39 = sbr.rel (0) target = $region21
    $region20: #{tpu_custom_call.1} parent=1 // pred_region
      %40 = dma.done [#allocation6], 2048
    $region21: #{tpu_custom_call.1} parent=1 // pred_fallthru
      _
    %v41 = vld [vmem:[#allocation2] sm:$0xff]
    %v42 = vld [vmem:[#allocation5] sm:$0xff]
    %v43 = vld [vmem:[#allocation5 + $0x8] sm:$0xff]
    %v44 = vld [vmem:[#allocation5 + $0x10] sm:$0xff]
    %v45 = vld [vmem:[#allocation5 + $0x18] sm:$0xff]
    %v46 = vld [vmem:[#allocation5 + $0x20] sm:$0xff]
    %v47 = vld [vmem:[#allocation5 + $0x28] sm:$0xff]
    %v48 = vld [vmem:[#allocation5 + $0x30] sm:$0xff]
    %v49 = vld [vmem:[#allocation5 + $0x38] sm:$0xff]
    %v50 = vld [vmem:[#allocation5 + $0x40] sm:$0xff]
    %v51 = vld [vmem:[#allocation5 + $0x48] sm:$0xff]
    %v52 = vld [vmem:[#allocation5 + $0x50] sm:$0xff]
    %v53 = vld [vmem:[#allocation5 + $0x58] sm:$0xff]
    %v54 = vld [vmem:[#allocation5 + $0x60] sm:$0xff]
    %v55 = vld [vmem:[#allocation5 + $0x68] sm:$0xff]
    %v56 = vld [vmem:[#allocation5 + $0x70] sm:$0xff]
    %v57 = vld [vmem:[#allocation5 + $0x78] sm:$0xff]
    %v58 = vld [vmem:[%s2] sm:$0x1]
    %v60 = vlaneseq
    %v61 = vshrl.u32 %v60, 7
    %v62 = vsub.s32 0, %v61
    %v63 = vrot.slane %v58, %v62
    %65 = vmatprep.subr.mxu0 0.0
    %66 = vmatpush1.msra.mxu0 %v42
    %67 = vmatprep.subr.mxu0 0.0
    %68 = vmatpush1.msra.mxu0 %v43
    %69 = vmatprep.subr.mxu0 0.0
    %70 = vmatpush1.msra.mxu0 %v44
    %71 = vmatprep.subr.mxu0 0.0
    %72 = vmatpush1.msra.mxu0 %v45
    %73 = vmatprep.subr.mxu0 0.0
    %74 = vmatpush1.msra.mxu0 %v46
    %75 = vmatprep.subr.mxu0 0.0
    %76 = vmatpush1.msra.mxu0 %v47
    %77 = vmatprep.subr.mxu0 0.0
    %78 = vmatpush1.msra.mxu0 %v48
    %79 = vmatprep.subr.mxu0 0.0
    %80 = vmatpush1.msra.mxu0 %v49
    %81 = vmatprep.subr.mxu0 0.0
    %82 = vmatpush1.msra.mxu0 %v50
    %83 = vmatprep.subr.mxu0 0.0
    %84 = vmatpush1.msra.mxu0 %v51
    %85 = vmatprep.subr.mxu0 0.0
    %86 = vmatpush1.msra.mxu0 %v52
    %87 = vmatprep.subr.mxu0 0.0
    %88 = vmatpush1.msra.mxu0 %v53
    %89 = vmatprep.subr.mxu0 0.0
    %90 = vmatpush1.msra.mxu0 %v54
    %91 = vmatprep.subr.mxu0 0.0
    %92 = vmatpush1.msra.mxu0 %v55
    %93 = vmatprep.subr.mxu0 0.0
    %94 = vmatpush1.msra.mxu0 %v56
    %95 = vmatprep.subr.mxu0 0.0
    %96 = vmatpush1.msra.mxu0 %v57
    %97 = vmatprep.subr.mxu0 0.0
    %98 = vmatpush1.msra.mxu0 0.0
    %99 = vmatprep.subr.mxu0 0.0
    %100 = vmatpush1.msra.mxu0 0.0
    %101 = vmatprep.subr.mxu0 0.0
    %102 = vmatpush1.msra.mxu0 0.0
    %103 = vmatprep.subr.mxu0 0.0
    %104 = vmatpush1.msra.mxu0 0.0
    %105 = vmatprep.subr.mxu0 0.0
    %106 = vmatpush1.msra.mxu0 0.0
    %107 = vmatprep.subr.mxu0 0.0
    %108 = vmatpush1.msra.mxu0 0.0
    %109 = vmatprep.subr.mxu0 0.0
    %110 = vmatpush1.msra.mxu0 0.0
    %111 = vmatprep.subr.mxu0 0.0
    %112 = vmatpush1.msra.mxu0 0.0
    %113 = vmatprep.subr.mxu0 0.0
    %114 = vmatpush1.msra.mxu0 0.0
    %115 = vmatprep.subr.mxu0 0.0
    %116 = vmatpush1.msra.mxu0 0.0
    %117 = vmatprep.subr.mxu0 0.0
    %118 = vmatpush1.msra.mxu0 0.0
    %119 = vmatprep.subr.mxu0 0.0
    %120 = vmatpush1.msra.mxu0 0.0
    %121 = vmatprep.subr.mxu0 0.0
    %122 = vmatpush1.msra.mxu0 0.0
    %123 = vmatprep.subr.mxu0 0.0
    %124 = vmatpush1.msra.mxu0 0.0
    %125 = vmatprep.subr.mxu0 0.0
    %126 = vmatpush1.msra.mxu0 0.0
    %127 = vmatprep.subr.mxu0 0.0
    %128 = vmatpush1.msra.mxu0 0.0
    %129 = vmatprep.mubr.f32.mxu0 0.0
    %130 = vmatmul.mubr.f32.gmra.mrb[0].mxu0 %v41
    %v131 = vpop.f32.mrb[0].mxu0
    %v132 = vadd.f32 %v63, %v131
    %v133 = vpop.f32.mrb[0].mxu0
    %134 = vdwg.mxu0
    %v135 = vmul.f32 %v132, %v132
    %136 = vadd.xlane.f32.xlu0 %v135
    %v137 = vpop.xlane.xlu0 %136
    %v138 = vmax.f32 %v137, 1e-24
    %v139 = vrsqrt.pop %v138
    %v140 = vmul.f32 %v132, %v139
    %141 = vst [vmem:[#allocation7] sm:$0xff] %v140
    // Predicated region
    $region22: #{tpu_custom_call.1} parent=1 // pred_check
      _
    $region23: #{tpu_custom_call.1} parent=1 // pred_check_branch
      %143 = sbr.rel (0) target = $region25
    $region24: #{tpu_custom_call.1} parent=1 // pred_region
      %s145 = ssub.s32 128, 128
      %146 = vsyncadd [#allocation4], %s145
      %s148 = sshll.u32 [#allocation7], 4
      %s149 = int_to_ptr.vmem [resolvable:$true] %s148
      %151 = dma.vmem_to_hbm [thread:$0]  %s149, 128, %s3, [#allocation4]
    $region25: #{tpu_custom_call.1} parent=1 // pred_fallthru
      _
    // Predicated region
    $region26: #{tpu_custom_call.1} parent=1 // pred_check
      _
    $region27: #{tpu_custom_call.1} parent=1 // pred_check_branch
      %153 = sbr.rel (0) target = $region29
    $region28: #{tpu_custom_call.1} parent=1 // pred_region
      %154 = dma.done [#allocation4], 128
    $region29: #{tpu_custom_call.1} parent=1 // pred_fallthru
      _
    %155 = vsyncpa [#allocation3], 1
    %156 = vsyncpa [#allocation6], 1
    %157 = vsyncpa [#allocation4], 1

</llo_original>
